<compile_context>
chip_gen: v7x
topology: tpu7x:2x2x1
jax: 0.10.0
libtpu: 0.0.40
codegen_flags: <defaults>
</compile_context>

<pallas_src>
import math

import jax
import jax.numpy as jnp
from jax import lax
from jax.experimental import pallas as pl
from jax.experimental.pallas import tpu as pltpu

_INV_SQRT2 = 1.0 / math.sqrt(2.0)

# Minimum number of grid steps we aim for (>= 2*TensorCores on v7x, and enough
# iterations for the DMA/compute/DMA pipeline to overlap).
_MIN_GRID_STEPS = 8


def _gelu_kernel(x_ref, o_ref):
    # Compute in float32 (mirrors `x.float()` in the torch reference), cast
    # back to the I/O dtype on the way out.  Minimal chain: 3 muls + 1 add +
    # one EUP erf per element; constants stay scalar.
    x = x_ref[...].astype(jnp.float32)
    o_ref[...] = (x * (0.5 * lax.erf(x * _INV_SQRT2) + 0.5)).astype(o_ref.dtype)
    # TODO(synk): if bundle dumps show VALU (not HBM) binding for bf16 on
    # v6e/v7x, move the two cheap multiplies to bf16 and keep only erf in f32.


def _gelu_jnp(x):
    xf = x.astype(jnp.float32)
    return (xf * (0.5 * lax.erf(xf * _INV_SQRT2) + 0.5)).astype(x.dtype)


def _round_up(v: int, m: int) -> int:
    return ((v + m - 1) // m) * m


def _vmem_capacity_bytes() -> int:
    try:
        return int(pltpu.get_tpu_info().vmem_capacity_bytes)
    except Exception:
        # Conservative fallback: assume the smallest (v7x-sized) VMEM.
        return 64 * 1024 * 1024


def _gelu_2d(x2d: jax.Array) -> jax.Array:
    """Run the Pallas kernel over a lane-dense (rows, width) slab."""
    rows, width = x2d.shape
    dtype = x2d.dtype
    itemsize = jnp.dtype(dtype).itemsize
    # Minimum sublane tile rows: 8 (f32), 16 (bf16/f16), 32 (int8/fp8).
    min_sub = max(8, 32 // itemsize)

    # Generation-aware block / VMEM budget.
    vmem_cap = _vmem_capacity_bytes()
    if vmem_cap >= 100 * 1024 * 1024:        # v5e / v6e: 128 MiB VMEM
        target_block_bytes = 16 * 1024 * 1024
        vmem_cap_limit = 100 * 1024 * 1024
    else:                                    # v7x: 64 MiB VMEM per core
        target_block_bytes = 8 * 1024 * 1024
        vmem_cap_limit = 48 * 1024 * 1024

    if rows < min_sub:
        # Tiny tensor: a single full-extent block (block == array dims).
        block_rows = rows
    else:
        block_rows = max(
            min_sub,
            (target_block_bytes // (width * itemsize)) // min_sub * min_sub,
        )
        # Keep the grid at >= _MIN_GRID_STEPS steps when the tensor is big
        # enough, so v7x's two TensorCores both get work and the pipeline
        # overlaps; never shrink below one sublane tile.
        rows_per_step_cap = max(
            min_sub, _round_up(pl.cdiv(rows, _MIN_GRID_STEPS), min_sub)
        )
        block_rows = min(block_rows, rows_per_step_cap)
        block_rows = min(block_rows, _round_up(rows, min_sub))

    grid = (pl.cdiv(rows, block_rows),)

    block_bytes = block_rows * width * itemsize
    # in + out, double-buffered, plus the f32 temporaries of the elementwise
    # chain for narrow dtypes, plus a little headroom; capped per generation.
    f32_temp_bytes = block_rows * width * 4
    vmem_limit = int(
        min(
            vmem_cap_limit,
            max(32 * 1024 * 1024,
                4 * block_bytes + f32_temp_bytes + 2 * 1024 * 1024),
        )
    )

    n = rows * width
    cost = pl.CostEstimate(
        flops=6 * n,
        transcendentals=n,
        bytes_accessed=2 * n * itemsize,
    )

    return pl.pallas_call(
        _gelu_kernel,
        out_shape=jax.ShapeDtypeStruct((rows, width), dtype),
        grid_spec=pltpu.PrefetchScalarGridSpec(
            num_scalar_prefetch=0,
            grid=grid,
            in_specs=[pl.BlockSpec((block_rows, width), lambda i: (i, 0))],
            out_specs=pl.BlockSpec((block_rows, width), lambda i: (i, 0)),
        ),
        compiler_params=pltpu.CompilerParams(
            dimension_semantics=("parallel",),
            vmem_limit_bytes=vmem_limit,
        ),
        cost_estimate=cost,
    )(x2d)


def gelu_pallas(x: jax.Array) -> jax.Array:
    """Exact-erf GeLU, elementwise, same shape/dtype as input."""
    if not jnp.issubdtype(x.dtype, jnp.floating):
        # torch.nn.functional.gelu rejects integer inputs; do the same.
        raise TypeError(f"gelu_pallas requires a floating dtype, got {x.dtype}")

    orig_shape = x.shape
    n = x.size
    if n == 0:
        return x

    itemsize = jnp.dtype(x.dtype).itemsize
    min_sub = max(8, 32 // itemsize)

    # Pick the widest lane-dense last dim that divides n and leaves at least
    # one full sublane tile of rows (keeps stores wide and unmasked).
    width = None
    for cand in (2048, 1024, 512, 256, 128):
        if n % cand == 0 and n // cand >= min_sub:
            width = cand
            break
    if width is None and n % 128 == 0:
        width = 128  # tiny input: fewer than min_sub rows; full-extent block

    flat = x.reshape(-1)

    if width is not None:
        out2d = _gelu_2d(flat.reshape(n // width, width))
        return out2d.reshape(orig_shape)

    # Odd element count: no padded full-array copy.  Run the kernel on the
    # 128-aligned prefix and finish the (<128-element) tail with plain jnp.
    n_bulk = (n // 128) * 128
    if n_bulk == 0:
        return _gelu_jnp(flat).reshape(orig_shape)
    bulk_out = _gelu_2d(flat[:n_bulk].reshape(n_bulk // 128, 128)).reshape(-1)
    tail_out = _gelu_jnp(flat[n_bulk:])
    return jnp.concatenate([bulk_out, tail_out]).reshape(orig_shape)


def _gelu_ref(x):
    xf = x.astype(jnp.float32)
    return (xf * 0.5 * (1.0 + lax.erf(xf * _INV_SQRT2))).astype(x.dtype)


if __name__ == "__main__":
    key = jax.random.PRNGKey(0)
    k0, k1, k2 = jax.random.split(key, 3)

    # Primary NCHW-like input, consistent with the module's elementwise use.
    x = jax.random.normal(k0, (2, 4, 16, 16), dtype=jnp.float32)
    y = gelu_pallas(x)
    jax.block_until_ready(y)
    assert y.shape == x.shape and y.dtype == x.dtype
    assert jnp.max(jnp.abs(y - _gelu_ref(x))) < 1e-5

    # Odd element count (255 = 128-aligned bulk + 127-element tail): exercises
    # the prefix-kernel + jnp-tail path (no padded full copy).
    x_odd = jax.random.normal(k1, (3, 5, 17), dtype=jnp.float32)
    y_odd = gelu_pallas(x_odd)
    jax.block_until_ready(y_odd)
    assert y_odd.shape == x_odd.shape
    assert jnp.max(jnp.abs(y_odd - _gelu_ref(x_odd))) < 1e-5

    # bf16 in/out with f32 compute inside the kernel (halved HBM traffic).
    x_bf = jax.random.normal(k2, (2, 4, 16, 16), dtype=jnp.bfloat16)
    y_bf = gelu_pallas(x_bf)
    jax.block_until_ready(y_bf)
    assert y_bf.dtype == jnp.bfloat16
    assert jnp.max(jnp.abs(y_bf.astype(jnp.float32)
                           - _gelu_ref(x_bf).astype(jnp.float32))) < 2e-2

    print("KERNEL_OK")
</pallas_src>

<mosaic_0001>
module attributes {stable_mosaic.version = 11 : i64} {
  func.func @_gelu_kernel(%arg0: i32, %arg1: memref<8x256xf32, #tpu.memory_space<vmem>>, %arg2: memref<8x256xf32, #tpu.memory_space<vmem>>) attributes {dimension_semantics = [#tpu.dimension_semantics<parallel>], iteration_bounds = array<i64: 1>, scalar_prefetch = 0 : i64, scratch_operands = 0 : i64, tpu.core_type = #tpu.core_type<tc>, window_params = [{transform_indices = @transform_0, window_bounds = array<i64: 8, 256>}, {transform_indices = @transform_1, window_bounds = array<i64: 8, 256>}]} {
    %c0 = arith.constant 0 : index
    %c0_0 = arith.constant 0 : index
    %0 = vector.load %arg1[%c0, %c0_0] : memref<8x256xf32, #tpu.memory_space<vmem>>, vector<8x256xf32>
    %cst = arith.constant 0.707106769 : f32
    %1 = vector.broadcast %cst : f32 to vector<8x256xf32>
    %2 = arith.mulf %0, %1 : vector<8x256xf32>
    %3 = math.erf %2 : vector<8x256xf32>
    %cst_1 = arith.constant 5.000000e-01 : f32
    %4 = vector.broadcast %cst_1 : f32 to vector<8x256xf32>
    %5 = arith.mulf %4, %3 : vector<8x256xf32>
    %cst_2 = arith.constant 5.000000e-01 : f32
    %6 = vector.broadcast %cst_2 : f32 to vector<8x256xf32>
    %7 = arith.addf %5, %6 : vector<8x256xf32>
    %8 = arith.mulf %0, %7 : vector<8x256xf32>
    %c0_3 = arith.constant 0 : index
    %c0_4 = arith.constant 0 : index
    %9 = vector.load %arg2[%c0_3, %c0_4] : memref<8x256xf32, #tpu.memory_space<vmem>>, vector<8x256xf32>
    tpu.vector_store %arg2[%c0_3, %c0_4], %8 {strides = array<i32>} : memref<8x256xf32, #tpu.memory_space<vmem>>, vector<8x256xf32>,
    return
  }
  func.func @transform_0(%arg0: i32) -> (i32, i32) {
    %c0_i32 = arith.constant 0 : i32
    %c0_i32_0 = arith.constant 0 : i32
    return %arg0, %c0_i32 : i32, i32
  }
  func.func @transform_1(%arg0: i32) -> (i32, i32) {
    %c0_i32 = arith.constant 0 : i32
    %c0_i32_0 = arith.constant 0 : i32
    return %arg0, %c0_i32 : i32, i32
  }
}

</mosaic_0001>

<llo_original>
// kernel: tpu_custom_call.1
$region0: #{tpu_custom_call.1}
  #allocation0 [shape = 'u32[]', space=smem, size = 0x4, offset = 0x4, fixed_abs, tag = 'smem constant byte address 0x4 - core index']
  #allocation1 [shape = 'u32[144,128]{1,0:T(1,128)}', space=vmem, size = 0x12000, scoped, tag = 'internal scratch']
  %s0 = inlined_call_operand.hbm [shape: f32[8,256], index: 0, kind: input, shape index: {}]
  %s1 = inlined_call_operand.hbm [shape: f32[8,256], index: 1, kind: output, shape index: {}]
  %s2 = sld [smem:[#allocation0]]
  $region18: #{tpu_custom_call.1} parent=0
    _
  %s4 = ssub.s32 1, %s2
  %s5 = scalar_select 0, %s4, %s2
  $region1: #{tpu_custom_call.1} parent=0
    #allocation2 [shape = 'u8[8192]{0}', space=vmem, size = 0x2000, scoped, tag = 'input window, operand 0, single buffered']
    #allocation3 [shape = 's32[1]{0}', space=sflag, size = 0x4, scoped, tag = 'scoped memory for tpu_custom_call.1']
    #allocation4 [shape = 's32[1]{0}', space=sflag, size = 0x4, scoped, tag = 'scoped memory for tpu_custom_call.1']
    #allocation5 [shape = 'u8[8192]{0}', space=vmem, size = 0x2000, scoped, tag = 'output window, operand 0, single buffered']
    %6 = vsyncpa [#allocation3], 0
    %7 = vsyncpa [#allocation4], 0
    // Predicated region
    $region2: #{tpu_custom_call.1} parent=1 // pred_check
      _
    $region3: #{tpu_custom_call.1} parent=1 // pred_check_branch
      %9 = sbr.rel (0) target = $region5
    $region4: #{tpu_custom_call.1} parent=1 // pred_region
      %s11 = ssub.s32 256, 256
      %12 = vsyncadd [#allocation3], %s11
      %s14 = sshll.u32 [#allocation2], 4
      %s15 = int_to_ptr.vmem [resolvable:$true] %s14
      %17 = dma.hbm_to_vmem [thread:$0]  %s0, 256, %s15, [#allocation3]
    $region5: #{tpu_custom_call.1} parent=1 // pred_fallthru
      _
    // Predicated region
    $region6: #{tpu_custom_call.1} parent=1 // pred_check
      _
    $region7: #{tpu_custom_call.1} parent=1 // pred_check_branch
      %19 = sbr.rel (0) target = $region9
    $region8: #{tpu_custom_call.1} parent=1 // pred_region
      %20 = dma.done [#allocation3], 256
    $region9: #{tpu_custom_call.1} parent=1 // pred_fallthru
      _
    %v21 = vld [vmem:[#allocation2] sm:$0xff]
    %v22 = vld [vmem:[#allocation2 + $0x8] sm:$0xff]
    %v23 = vmul.f32 %v21, 0.70710677
    %v24 = vmul.f32 %v22, 0.70710677
    %v25 = verf.f32.pop %v23
    %v26 = verf.f32.pop %v24
    %v27 = vmul.f32 %v25, 0.5
    %v28 = vmul.f32 %v26, 0.5
    %v29 = vadd.f32 %v27, 0.5
    %v30 = vadd.f32 %v28, 0.5
    %v31 = vmul.f32 %v21, %v29
    %v32 = vmul.f32 %v22, %v30
    %33 = vst [vmem:[#allocation5] sm:$0xff] %v31
    %34 = vst [vmem:[#allocation5 + $0x8] sm:$0xff] %v32
    // Predicated region
    $region10: #{tpu_custom_call.1} parent=1 // pred_check
      _
    $region11: #{tpu_custom_call.1} parent=1 // pred_check_branch
      %36 = sbr.rel (0) target = $region13
    $region12: #{tpu_custom_call.1} parent=1 // pred_region
      %s38 = ssub.s32 256, 256
      %39 = vsyncadd [#allocation4], %s38
      %s41 = sshll.u32 [#allocation5], 4
      %s42 = int_to_ptr.vmem [resolvable:$true] %s41
      %44 = dma.vmem_to_hbm [thread:$0]  %s42, 256, %s1, [#allocation4]
    $region13: #{tpu_custom_call.1} parent=1 // pred_fallthru
      _
    // Predicated region
    $region14: #{tpu_custom_call.1} parent=1 // pred_check
      _
    $region15: #{tpu_custom_call.1} parent=1 // pred_check_branch
      %46 = sbr.rel (0) target = $region17
    $region16: #{tpu_custom_call.1} parent=1 // pred_region
      %47 = dma.done [#allocation4], 256
    $region17: #{tpu_custom_call.1} parent=1 // pred_fallthru
      _
    %48 = vsyncpa [#allocation3], 1
    %49 = vsyncpa [#allocation4], 1

</llo_original>
